<compile_context>
chip_gen: v6e
topology: v6e:2x2x1
jax: 0.10.0
libtpu: 0.0.40
codegen_flags: <defaults>
</compile_context>

<pallas_src>
import math
import numpy as np
import jax
import jax.numpy as jnp
from jax.experimental import pallas as pl
from jax.experimental.pallas import tpu as pltpu

# ---- small config consistent with ModelArgs / EncoderBlock ----
DIM = 48
N_HEADS = 4
N_KV_HEADS = 2
HEAD_DIM = DIM // N_HEADS              # 12
KV_DIM = N_KV_HEADS * HEAD_DIM         # 24
N_REP = N_HEADS // N_KV_HEADS          # 2
MULTIPLE_OF = 128
HIDDEN_DIM = int(2 * (4 * DIM) / 3)    # 128
HIDDEN = MULTIPLE_OF * ((HIDDEN_DIM + MULTIPLE_OF - 1) // MULTIPLE_OF)  # 128
assert HIDDEN == HIDDEN_DIM            # required so swish * x_V is well-formed
EPS = 1e-5

BATCH = 2
SEQ = 8
START_POS = 0


def _rmsnorm(x, w):
    ms = jnp.mean(x * x, axis=-1, keepdims=True)
    return w * (x * jax.lax.rsqrt(ms + EPS))


# ---------------- fused per-batch kernel: norm + QKV(+RoPE) + attention + wo + FFN -------
def encoder_block_kernel(x_ref, wbase_ref, wrot_ref, cos_ref, sin_ref, mask_ref,
                         wo_ref, w13_ref, w2_ref, out_ref):
    f32 = jnp.float32
    bf16 = jnp.bfloat16
    x = x_ref[...]                                                   # (S, D) f32

    # attention RMSNorm (norm weight already folded into wbase/wrot rows)
    xn = x * jax.lax.rsqrt(jnp.mean(x * x, axis=-1, keepdims=True) + EPS)
    xb = xn.astype(bf16)

    # fused projection; RoPE rotation pre-folded into wrot (two independent MXU ops)
    base = jnp.dot(xb, wbase_ref[...], preferred_element_type=f32)   # (S, 3D)
    rot = jnp.dot(xb, wrot_ref[...], preferred_element_type=f32)     # (S, 3D)
    qkv = base * cos_ref[...] + rot * sin_ref[...]                   # (S, 3D)

    q = qkv[:, :DIM].astype(bf16)           # (S, D); 1/sqrt(head_dim) folded into weights
    k_rep = qkv[:, DIM:2 * DIM]             # (S, D); kv heads pre-repeated per query head
    v_rep = qkv[:, 2 * DIM:]                # (S, D); RoPE'd V (reference quirk)

    mask = mask_ref[...]                    # (H*S, D) block-diagonal 0/1, f32
    mask16 = mask.astype(bf16)
    # block-diagonal K / V: sublane-tile over heads, zero other heads' columns
    k_bd = (jnp.concatenate([k_rep] * N_HEADS, axis=0) * mask).astype(bf16)   # (H*S, D)
    v_bd = (jnp.concatenate([v_rep] * N_HEADS, axis=0) * mask).astype(bf16)   # (H*S, D)

    # scores for all heads at once: s[:, h*S:(h+1)*S] = q_h @ k_h^T / sqrt(head_dim)
    s = jnp.einsum('sd,td->st', q, k_bd, preferred_element_type=f32)          # (S, H*S)
    # segmented softmax: a per-row global max is a valid shift for every S-lane segment
    m = jnp.max(s, axis=-1, keepdims=True)
    e = jnp.exp(s - m)
    e16 = e.astype(bf16)
    # unnormalized PV and per-head denominators (broadcast onto head columns):
    # two independent MXU ops against the same block-diagonal structure
    o_un = jnp.dot(e16, v_bd, preferred_element_type=f32)                     # (S, D)
    den = jnp.dot(e16, mask16, preferred_element_type=f32)                    # (S, D)
    o = o_un * pl.reciprocal(den, approx=True)
    attn = jnp.dot(o.astype(bf16), wo_ref[...], preferred_element_type=f32)   # (S, D)

    # residual + SwiGLU FFN (ffn-norm weight folded into w13 rows)
    h = x + attn
    hn = h * jax.lax.rsqrt(jnp.mean(h * h, axis=-1, keepdims=True) + EPS)
    a13 = jnp.dot(hn.astype(bf16), w13_ref[...], preferred_element_type=f32)  # (S, 2*HIDDEN)
    a1 = a13[:, :HIDDEN]
    a3 = a13[:, HIDDEN:]
    gate = (a1 * jax.nn.sigmoid(a1)) * a3
    ff = jnp.dot(gate.astype(bf16), w2_ref[...], preferred_element_type=f32)  # (S, D)
    out_ref[...] = h + ff


# ---------------- wrapper ----------------
@jax.jit
def encoder_block_pallas(x, fused):
    B, S, D = x.shape
    assert (B, S, D) == (BATCH, SEQ, DIM)
    x_flat = x.reshape(B * S, D)
    out_flat = pl.pallas_call(
        encoder_block_kernel,
        out_shape=jax.ShapeDtypeStruct((B * S, D), jnp.float32),
        grid=(B,),
        in_specs=[
            pl.BlockSpec((SEQ, DIM), lambda b: (b, 0)),             # this batch's x rows
            pl.BlockSpec((DIM, 3 * DIM), lambda b: (0, 0)),         # wbase (norm+scale folded)
            pl.BlockSpec((DIM, 3 * DIM), lambda b: (0, 0)),         # wrot  (wbase @ RotBig)
            pl.BlockSpec((SEQ, 3 * DIM), lambda b: (0, 0)),         # cos table (shared)
            pl.BlockSpec((SEQ, 3 * DIM), lambda b: (0, 0)),         # sin table (shared)
            pl.BlockSpec((N_HEADS * SEQ, DIM), lambda b: (0, 0)),   # block-diag mask
            pl.BlockSpec((DIM, DIM), lambda b: (0, 0)),             # wo
            pl.BlockSpec((DIM, 2 * HIDDEN), lambda b: (0, 0)),      # w1|w3 (norm folded)
            pl.BlockSpec((HIDDEN, DIM), lambda b: (0, 0)),          # w2
        ],
        out_specs=pl.BlockSpec((SEQ, DIM), lambda b: (b, 0)),
        compiler_params=pltpu.CompilerParams(dimension_semantics=("parallel",)),
    )(x_flat, fused['wbase'], fused['wrot'], fused['cos'], fused['sin'],
      fused['mask'], fused['wo'], fused['w13'], fused['w2'])
    return out_flat.reshape(B, S, D)


# ---------------- one-time weight / table preparation (host side) ----------------
def build_fused_params(params, cos_head, sin_head, rot_head):
    f32 = jnp.float32
    bf16 = jnp.bfloat16
    inv_scale = 1.0 / math.sqrt(HEAD_DIM)

    def repeat_cols(w):   # (D, KV_DIM) -> (D, D): kv-head columns repeated per query head
        blocks = []
        for h in range(N_HEADS):
            kvh = h // N_REP
            blocks.append(w[:, kvh * HEAD_DIM:(kvh + 1) * HEAD_DIM])
        return jnp.concatenate(blocks, axis=1)

    wq = params['wq'] * inv_scale                      # fold 1/sqrt(head_dim) into Q
    wbase = jnp.concatenate(
        [wq, repeat_cols(params['wk']), repeat_cols(params['wv'])], axis=1)   # (D, 3D)
    wbase = params['attn_norm'].reshape(DIM, 1) * wbase  # fold attention RMSNorm weight

    rot_np = np.array(rot_head, np.float32)            # (hd, hd) signed pair-swap
    rot_big = np.zeros((3 * DIM, 3 * DIM), np.float32)
    for h in range(N_HEADS):
        oq = h * HEAD_DIM
        rot_big[oq:oq + HEAD_DIM, oq:oq + HEAD_DIM] = rot_np          # Q heads
        ov = 2 * DIM + h * HEAD_DIM
        rot_big[ov:ov + HEAD_DIM, ov:ov + HEAD_DIM] = rot_np          # V heads (K untouched)
    wrot = wbase @ jnp.asarray(rot_big)                # (D, 3D)

    cos_q = jnp.tile(cos_head, (1, N_HEADS))           # (S, D)
    sin_q = jnp.tile(sin_head, (1, N_HEADS))
    cos = jnp.concatenate([cos_q, jnp.ones((SEQ, DIM), f32), cos_q], axis=1)   # (S, 3D)
    sin = jnp.concatenate([sin_q, jnp.zeros((SEQ, DIM), f32), sin_q], axis=1)  # (S, 3D)

    mask = np.zeros((N_HEADS * SEQ, DIM), np.float32)  # block-diag (S x head_dim blocks)
    for h in range(N_HEADS):
        mask[h * SEQ:(h + 1) * SEQ, h * HEAD_DIM:(h + 1) * HEAD_DIM] = 1.0

    w13 = jnp.concatenate([params['w1'], params['w3']], axis=1)       # (D, 2*HIDDEN)
    w13 = params['ffn_norm'].reshape(DIM, 1) * w13     # fold ffn RMSNorm weight

    return {
        'wbase': wbase.astype(bf16), 'wrot': wrot.astype(bf16),
        'cos': cos, 'sin': sin, 'mask': jnp.asarray(mask),
        'wo': params['wo'].astype(bf16),
        'w13': w13.astype(bf16), 'w2': params['w2'].astype(bf16),
    }


# ---------------- pure-JAX reference (mirrors the PyTorch module) ----------------
def encoder_block_ref(x, params, cos_full, sin_full, rot):
    B, S, D = x.shape
    xn = _rmsnorm(x, params['attn_norm'][0])
    q = xn @ params['wq']
    k = xn @ params['wk']
    v = xn @ params['wv']
    q = q.reshape(B, S, N_HEADS, HEAD_DIM)
    k = k.reshape(B, S, N_KV_HEADS, HEAD_DIM)
    v = v.reshape(B, S, N_KV_HEADS, HEAD_DIM)

    def rope(t):
        return t * cos_full[None, :, None, :] + (t @ rot) * sin_full[None, :, None, :]

    q = rope(q)
    v = rope(v)                             # matches the reference (RoPE on V, not K)
    k = jnp.repeat(k, N_REP, axis=2)
    v = jnp.repeat(v, N_REP, axis=2)
    qT = q.transpose(0, 2, 1, 3)
    kT = k.transpose(0, 2, 1, 3)
    vT = v.transpose(0, 2, 1, 3)
    scores = jnp.einsum('bhqd,bhkd->bhqk', qT, kT / math.sqrt(HEAD_DIM))
    p = jax.nn.softmax(scores, axis=-1)
    o = jnp.einsum('bhqk,bhkd->bhqd', p, vT)
    o = o.transpose(0, 2, 1, 3).reshape(B, S, D)
    h = x + o @ params['wo']
    hn = _rmsnorm(h, params['ffn_norm'][0])
    ff = (jax.nn.silu(hn @ params['w1']) * (hn @ params['w3'])) @ params['w2']
    return h + ff


if __name__ == "__main__":
    key = jax.random.PRNGKey(0)
    ks = jax.random.split(key, 10)
    params = {
        'wq': 0.05 * jax.random.normal(ks[0], (DIM, DIM), jnp.float32),
        'wk': 0.05 * jax.random.normal(ks[1], (DIM, KV_DIM), jnp.float32),
        'wv': 0.05 * jax.random.normal(ks[2], (DIM, KV_DIM), jnp.float32),
        'wo': 0.05 * jax.random.normal(ks[3], (DIM, DIM), jnp.float32),
        'w1': 0.05 * jax.random.normal(ks[4], (DIM, HIDDEN_DIM), jnp.float32),
        'w2': 0.05 * jax.random.normal(ks[5], (HIDDEN_DIM, DIM), jnp.float32),
        'w3': 0.05 * jax.random.normal(ks[6], (DIM, HIDDEN), jnp.float32),
        'attn_norm': 1.0 + 0.1 * jax.random.normal(ks[7], (1, DIM), jnp.float32),
        'ffn_norm': 1.0 + 0.1 * jax.random.normal(ks[8], (1, DIM), jnp.float32),
    }
    x = jax.random.normal(ks[9], (BATCH, SEQ, DIM), jnp.float32)

    # rotary tables (freqs_complex equivalent): cos/sin expanded to interleaved pairs
    pos = jnp.arange(START_POS, START_POS + SEQ, dtype=jnp.float32)
    inv_freq = 1.0 / (10000.0 ** (jnp.arange(0, HEAD_DIM, 2, dtype=jnp.float32) / HEAD_DIM))
    angles = pos[:, None] * inv_freq[None, :]                    # (S, head_dim//2)
    cos_full = jnp.repeat(jnp.cos(angles), 2, axis=-1)           # (S, head_dim)
    sin_full = jnp.repeat(jnp.sin(angles), 2, axis=-1)
    Rm = np.zeros((HEAD_DIM, HEAD_DIM), np.float32)
    for i in range(HEAD_DIM // 2):
        Rm[2 * i + 1, 2 * i] = -1.0
        Rm[2 * i, 2 * i + 1] = 1.0
    rot = jnp.asarray(Rm)

    fused = build_fused_params(params, cos_full, sin_full, rot)

    out = jax.block_until_ready(encoder_block_pallas(x, fused))
    ref = jax.block_until_ready(encoder_block_ref(x, params, cos_full, sin_full, rot))

    assert out.shape == (BATCH, SEQ, DIM), out.shape
    # bf16 MXU operands (fp32 accumulation) -> bf16-level tolerance vs the fp32 reference
    err = float(jnp.max(jnp.abs(out - ref)))
    if not err < 2e-2:
        raise AssertionError(f"mismatch vs reference: max abs err = {err}")
    print("KERNEL_OK")
</pallas_src>

<mosaic_0001>
module attributes {stable_mosaic.version = 11 : i64} {
  func.func @encoder_block_kernel(%arg0: i32, %arg1: memref<8x48xf32, #tpu.memory_space<vmem>>, %arg2: memref<48x144xbf16, #tpu.memory_space<vmem>>, %arg3: memref<48x144xbf16, #tpu.memory_space<vmem>>, %arg4: memref<8x144xf32, #tpu.memory_space<vmem>>, %arg5: memref<8x144xf32, #tpu.memory_space<vmem>>, %arg6: memref<32x48xf32, #tpu.memory_space<vmem>>, %arg7: memref<48x48xbf16, #tpu.memory_space<vmem>>, %arg8: memref<48x256xbf16, #tpu.memory_space<vmem>>, %arg9: memref<128x48xbf16, #tpu.memory_space<vmem>>, %arg10: memref<8x48xf32, #tpu.memory_space<vmem>>) attributes {dimension_semantics = [#tpu.dimension_semantics<parallel>], iteration_bounds = array<i64: 2>, scalar_prefetch = 0 : i64, scratch_operands = 0 : i64, tpu.core_type = #tpu.core_type<tc>, window_params = [{transform_indices = @transform_0, window_bounds = array<i64: 8, 48>}, {pipeline_mode = #tpu.pipeline_mode<synchronous>, transform_indices = @transform_1, window_bounds = array<i64: 48, 144>}, {pipeline_mode = #tpu.pipeline_mode<synchronous>, transform_indices = @transform_2, window_bounds = array<i64: 48, 144>}, {pipeline_mode = #tpu.pipeline_mode<synchronous>, transform_indices = @transform_3, window_bounds = array<i64: 8, 144>}, {pipeline_mode = #tpu.pipeline_mode<synchronous>, transform_indices = @transform_4, window_bounds = array<i64: 8, 144>}, {pipeline_mode = #tpu.pipeline_mode<synchronous>, transform_indices = @transform_5, window_bounds = array<i64: 32, 48>}, {pipeline_mode = #tpu.pipeline_mode<synchronous>, transform_indices = @transform_6, window_bounds = array<i64: 48, 48>}, {pipeline_mode = #tpu.pipeline_mode<synchronous>, transform_indices = @transform_7, window_bounds = array<i64: 48, 256>}, {pipeline_mode = #tpu.pipeline_mode<synchronous>, transform_indices = @transform_8, window_bounds = array<i64: 128, 48>}, {transform_indices = @transform_9, window_bounds = array<i64: 8, 48>}]} {
    %c0 = arith.constant 0 : index
    %c0_0 = arith.constant 0 : index
    %0 = vector.load %arg1[%c0, %c0_0] : memref<8x48xf32, #tpu.memory_space<vmem>>, vector<8x48xf32>
    %1 = arith.mulf %0, %0 : vector<8x48xf32>
    %cst = arith.constant dense<0.000000e+00> : vector<8xf32>
    %2 = vector.multi_reduction <add>, %1, %cst [1] : vector<8x48xf32> to vector<8xf32>
    %3 = vector.shape_cast %2 : vector<8xf32> to vector<8x1xf32>
    %cst_1 = arith.constant 4.800000e+01 : f32
    %4 = vector.broadcast %cst_1 : f32 to vector<8x1xf32>
    %5 = arith.divf %3, %4 : vector<8x1xf32>
    %cst_2 = arith.constant 9.99999974E-6 : f32
    %6 = vector.broadcast %cst_2 : f32 to vector<8x1xf32>
    %7 = arith.addf %5, %6 : vector<8x1xf32>
    %8 = math.rsqrt %7 : vector<8x1xf32>
    %9 = vector.broadcast %8 : vector<8x1xf32> to vector<8x48xf32>
    %10 = arith.mulf %0, %9 : vector<8x48xf32>
    %11 = arith.truncf %10 : vector<8x48xf32> to vector<8x48xbf16>
    %c0_3 = arith.constant 0 : index
    %c0_4 = arith.constant 0 : index
    %12 = vector.load %arg2[%c0_3, %c0_4] : memref<48x144xbf16, #tpu.memory_space<vmem>>, vector<48x144xbf16>
    %cst_5 = arith.constant dense<0.000000e+00> : vector<8x144xf32>
    %13 = tpu.matmul %11, %12, %cst_5 {dimension_numbers = #tpu.dot_dimension_numbers<[1], [0], [0], [1], [0, 0, 1, 1], [], []>} : vector<8x48xbf16>, vector<48x144xbf16>, vector<8x144xf32> -> vector<8x144xf32>
    %c0_6 = arith.constant 0 : index
    %c0_7 = arith.constant 0 : index
    %14 = vector.load %arg3[%c0_6, %c0_7] : memref<48x144xbf16, #tpu.memory_space<vmem>>, vector<48x144xbf16>
    %cst_8 = arith.constant dense<0.000000e+00> : vector<8x144xf32>
    %15 = tpu.matmul %11, %14, %cst_8 {dimension_numbers = #tpu.dot_dimension_numbers<[1], [0], [0], [1], [0, 0, 1, 1], [], []>} : vector<8x48xbf16>, vector<48x144xbf16>, vector<8x144xf32> -> vector<8x144xf32>
    %c0_9 = arith.constant 0 : index
    %c0_10 = arith.constant 0 : index
    %16 = vector.load %arg4[%c0_9, %c0_10] : memref<8x144xf32, #tpu.memory_space<vmem>>, vector<8x144xf32>
    %17 = arith.mulf %13, %16 : vector<8x144xf32>
    %c0_11 = arith.constant 0 : index
    %c0_12 = arith.constant 0 : index
    %18 = vector.load %arg5[%c0_11, %c0_12] : memref<8x144xf32, #tpu.memory_space<vmem>>, vector<8x144xf32>
    %19 = arith.mulf %15, %18 : vector<8x144xf32>
    %20 = arith.addf %17, %19 : vector<8x144xf32>
    %21 = vector.extract_strided_slice %20 {offsets = [0, 0], sizes = [8, 48], strides = [1, 1]} : vector<8x144xf32> to vector<8x48xf32>
    %22 = arith.truncf %21 : vector<8x48xf32> to vector<8x48xbf16>
    %23 = vector.extract_strided_slice %20 {offsets = [0, 48], sizes = [8, 48], strides = [1, 1]} : vector<8x144xf32> to vector<8x48xf32>
    %24 = vector.extract_strided_slice %20 {offsets = [0, 96], sizes = [8, 48], strides = [1, 1]} : vector<8x144xf32> to vector<8x48xf32>
    %c0_13 = arith.constant 0 : index
    %c0_14 = arith.constant 0 : index
    %25 = vector.load %arg6[%c0_13, %c0_14] : memref<32x48xf32, #tpu.memory_space<vmem>>, vector<32x48xf32>
    %26 = arith.truncf %25 : vector<32x48xf32> to vector<32x48xbf16>
    %27 = tpu.concatenate %23, %23, %23, %23 in 0 : vector<8x48xf32>, vector<8x48xf32>, vector<8x48xf32>, vector<8x48xf32> -> vector<32x48xf32>
    %28 = arith.mulf %27, %25 : vector<32x48xf32>
    %29 = arith.truncf %28 : vector<32x48xf32> to vector<32x48xbf16>
    %30 = tpu.concatenate %24, %24, %24, %24 in 0 : vector<8x48xf32>, vector<8x48xf32>, vector<8x48xf32>, vector<8x48xf32> -> vector<32x48xf32>
    %31 = arith.mulf %30, %25 : vector<32x48xf32>
    %32 = arith.truncf %31 : vector<32x48xf32> to vector<32x48xbf16>
    "tpu.trace_start"() <{level = 10 : i32, message = "sd,td->st"}> : () -> ()
    %cst_15 = arith.constant dense<0.000000e+00> : vector<8x32xf32>
    %33 = tpu.matmul %22, %29, %cst_15 {dimension_numbers = #tpu.dot_dimension_numbers<[1], [1], [0], [0], [0, 0, 1, 0], [], []>} : vector<8x48xbf16>, vector<32x48xbf16>, vector<8x32xf32> -> vector<8x32xf32>
    "tpu.trace_stop"() : () -> ()
    %cst_16 = arith.constant dense<0xFF800000> : vector<8xf32>
    %34 = vector.multi_reduction <maximumf>, %33, %cst_16 [1] : vector<8x32xf32> to vector<8xf32>
    %35 = vector.shape_cast %34 : vector<8xf32> to vector<8x1xf32>
    %36 = vector.broadcast %35 : vector<8x1xf32> to vector<8x32xf32>
    %37 = arith.subf %33, %36 : vector<8x32xf32>
    %38 = math.exp %37 : vector<8x32xf32>
    %39 = arith.truncf %38 : vector<8x32xf32> to vector<8x32xbf16>
    %cst_17 = arith.constant dense<0.000000e+00> : vector<8x48xf32>
    %40 = tpu.matmul %39, %32, %cst_17 {dimension_numbers = #tpu.dot_dimension_numbers<[1], [0], [0], [1], [0, 0, 1, 1], [], []>} : vector<8x32xbf16>, vector<32x48xbf16>, vector<8x48xf32> -> vector<8x48xf32>
    %cst_18 = arith.constant dense<0.000000e+00> : vector<8x48xf32>
    %41 = tpu.matmul %39, %26, %cst_18 {dimension_numbers = #tpu.dot_dimension_numbers<[1], [0], [0], [1], [0, 0, 1, 1], [], []>} : vector<8x32xbf16>, vector<32x48xbf16>, vector<8x48xf32> -> vector<8x48xf32>
    %42 = tpu.reciprocal %41 {approx = true} : vector<8x48xf32> -> vector<8x48xf32>
    %43 = arith.mulf %40, %42 : vector<8x48xf32>
    %44 = arith.truncf %43 : vector<8x48xf32> to vector<8x48xbf16>
    %c0_19 = arith.constant 0 : index
    %c0_20 = arith.constant 0 : index
    %45 = vector.load %arg7[%c0_19, %c0_20] : memref<48x48xbf16, #tpu.memory_space<vmem>>, vector<48x48xbf16>
    %cst_21 = arith.constant dense<0.000000e+00> : vector<8x48xf32>
    %46 = tpu.matmul %44, %45, %cst_21 {dimension_numbers = #tpu.dot_dimension_numbers<[1], [0], [0], [1], [0, 0, 1, 1], [], []>} : vector<8x48xbf16>, vector<48x48xbf16>, vector<8x48xf32> -> vector<8x48xf32>
    %47 = arith.addf %0, %46 : vector<8x48xf32>
    %48 = arith.mulf %47, %47 : vector<8x48xf32>
    %cst_22 = arith.constant dense<0.000000e+00> : vector<8xf32>
    %49 = vector.multi_reduction <add>, %48, %cst_22 [1] : vector<8x48xf32> to vector<8xf32>
    %50 = vector.shape_cast %49 : vector<8xf32> to vector<8x1xf32>
    %cst_23 = arith.constant 4.800000e+01 : f32
    %51 = vector.broadcast %cst_23 : f32 to vector<8x1xf32>
    %52 = arith.divf %50, %51 : vector<8x1xf32>
    %cst_24 = arith.constant 9.99999974E-6 : f32
    %53 = vector.broadcast %cst_24 : f32 to vector<8x1xf32>
    %54 = arith.addf %52, %53 : vector<8x1xf32>
    %55 = math.rsqrt %54 : vector<8x1xf32>
    %56 = vector.broadcast %55 : vector<8x1xf32> to vector<8x48xf32>
    %57 = arith.mulf %47, %56 : vector<8x48xf32>
    %58 = arith.truncf %57 : vector<8x48xf32> to vector<8x48xbf16>
    %c0_25 = arith.constant 0 : index
    %c0_26 = arith.constant 0 : index
    %59 = vector.load %arg8[%c0_25, %c0_26] : memref<48x256xbf16, #tpu.memory_space<vmem>>, vector<48x256xbf16>
    %cst_27 = arith.constant dense<0.000000e+00> : vector<8x256xf32>
    %60 = tpu.matmul %58, %59, %cst_27 {dimension_numbers = #tpu.dot_dimension_numbers<[1], [0], [0], [1], [0, 0, 1, 1], [], []>} : vector<8x48xbf16>, vector<48x256xbf16>, vector<8x256xf32> -> vector<8x256xf32>
    %61 = vector.extract_strided_slice %60 {offsets = [0, 0], sizes = [8, 128], strides = [1, 1]} : vector<8x256xf32> to vector<8x128xf32>
    %62 = vector.extract_strided_slice %60 {offsets = [0, 128], sizes = [8, 128], strides = [1, 1]} : vector<8x256xf32> to vector<8x128xf32>
    %63 = arith.negf %61 : vector<8x128xf32>
    %64 = math.exp %63 : vector<8x128xf32>
    %cst_28 = arith.constant 1.000000e+00 : f32
    %65 = vector.broadcast %cst_28 : f32 to vector<8x128xf32>
    %66 = arith.addf %65, %64 : vector<8x128xf32>
    %67 = arith.divf %65, %66 : vector<8x128xf32>
    %68 = arith.mulf %61, %67 : vector<8x128xf32>
    %69 = arith.mulf %68, %62 : vector<8x128xf32>
    %70 = arith.truncf %69 : vector<8x128xf32> to vector<8x128xbf16>
    %c0_29 = arith.constant 0 : index
    %c0_30 = arith.constant 0 : index
    %71 = vector.load %arg9[%c0_29, %c0_30] : memref<128x48xbf16, #tpu.memory_space<vmem>>, vector<128x48xbf16>
    %cst_31 = arith.constant dense<0.000000e+00> : vector<8x48xf32>
    %72 = tpu.matmul %70, %71, %cst_31 {dimension_numbers = #tpu.dot_dimension_numbers<[1], [0], [0], [1], [0, 0, 1, 1], [], []>} : vector<8x128xbf16>, vector<128x48xbf16>, vector<8x48xf32> -> vector<8x48xf32>
    %73 = arith.addf %47, %72 : vector<8x48xf32>
    %c0_32 = arith.constant 0 : index
    %c0_33 = arith.constant 0 : index
    %74 = vector.load %arg10[%c0_32, %c0_33] : memref<8x48xf32, #tpu.memory_space<vmem>>, vector<8x48xf32>
    tpu.vector_store %arg10[%c0_32, %c0_33], %73 {strides = array<i32>} : memref<8x48xf32, #tpu.memory_space<vmem>>, vector<8x48xf32>,
    return
  }
  func.func @transform_0(%arg0: i32) -> (i32, i32) {
    %c0_i32 = arith.constant 0 : i32
    %c0_i32_0 = arith.constant 0 : i32
    return %arg0, %c0_i32 : i32, i32
  }
  func.func @transform_1(%arg0: i32) -> (i32, i32) {
    %c0_i32 = arith.constant 0 : i32
    %c0_i32_0 = arith.constant 0 : i32
    %c0_i32_1 = arith.constant 0 : i32
    return %c0_i32, %c0_i32_0 : i32, i32
  }
  func.func @transform_2(%arg0: i32) -> (i32, i32) {
    %c0_i32 = arith.constant 0 : i32
    %c0_i32_0 = arith.constant 0 : i32
    %c0_i32_1 = arith.constant 0 : i32
    return %c0_i32, %c0_i32_0 : i32, i32
  }
  func.func @transform_3(%arg0: i32) -> (i32, i32) {
    %c0_i32 = arith.constant 0 : i32
    %c0_i32_0 = arith.constant 0 : i32
    %c0_i32_1 = arith.constant 0 : i32
    return %c0_i32, %c0_i32_0 : i32, i32
  }
  func.func @transform_4(%arg0: i32) -> (i32, i32) {
    %c0_i32 = arith.constant 0 : i32
    %c0_i32_0 = arith.constant 0 : i32
    %c0_i32_1 = arith.constant 0 : i32
    return %c0_i32, %c0_i32_0 : i32, i32
  }
  func.func @transform_5(%arg0: i32) -> (i32, i32) {
    %c0_i32 = arith.constant 0 : i32
    %c0_i32_0 = arith.constant 0 : i32
    %c0_i32_1 = arith.constant 0 : i32
    return %c0_i32, %c0_i32_0 : i32, i32
  }
  func.func @transform_6(%arg0: i32) -> (i32, i32) {
    %c0_i32 = arith.constant 0 : i32
    %c0_i32_0 = arith.constant 0 : i32
    %c0_i32_1 = arith.constant 0 : i32
    return %c0_i32, %c0_i32_0 : i32, i32
  }
  func.func @transform_7(%arg0: i32) -> (i32, i32) {
    %c0_i32 = arith.constant 0 : i32
    %c0_i32_0 = arith.constant 0 : i32
    %c0_i32_1 = arith.constant 0 : i32
    return %c0_i32, %c0_i32_0 : i32, i32
  }
  func.func @transform_8(%arg0: i32) -> (i32, i32) {
    %c0_i32 = arith.constant 0 : i32
    %c0_i32_0 = arith.constant 0 : i32
    %c0_i32_1 = arith.constant 0 : i32
    return %c0_i32, %c0_i32_0 : i32, i32
  }
  func.func @transform_9(%arg0: i32) -> (i32, i32) {
    %c0_i32 = arith.constant 0 : i32
    %c0_i32_0 = arith.constant 0 : i32
    return %arg0, %c0_i32 : i32, i32
  }
}

</mosaic_0001>

<llo_original>
// kernel: encoder_block_pallas.1
$region0: #{encoder_block_pallas.1}
  #allocation0 [shape = 'u32[]', space=smem, size = 0x4, offset = 0x4, fixed_abs, tag = 'smem constant byte address 0x4 - core index']
  #allocation1 [shape = 'u32[144,128]{1,0:T(1,128)}', space=vmem, size = 0x12000, scoped, tag = 'internal scratch']
  %s0 = inlined_call_operand.hbm [shape: f32[16,48], index: 0, kind: input, shape index: {}]
  %s1 = inlined_call_operand.vmem [shape: bf16[48,144], index: 1, kind: input, shape index: {}]
  %s2 = inlined_call_operand.vmem [shape: bf16[48,144], index: 2, kind: input, shape index: {}]
  %s3 = inlined_call_operand.hbm [shape: f32[8,144], index: 3, kind: input, shape index: {}]
  %s4 = inlined_call_operand.hbm [shape: f32[8,144], index: 4, kind: input, shape index: {}]
  %s5 = inlined_call_operand.hbm [shape: f32[32,48], index: 5, kind: input, shape index: {}]
  %s6 = inlined_call_operand.hbm [shape: bf16[48,48], index: 6, kind: input, shape index: {}]
  %s7 = inlined_call_operand.hbm [shape: bf16[48,256], index: 7, kind: input, shape index: {}]
  %s8 = inlined_call_operand.vmem [shape: bf16[128,48], index: 8, kind: input, shape index: {}]
  %s9 = inlined_call_operand.hbm [shape: f32[16,48], index: 9, kind: output, shape index: {}]
  %s10 = sld [smem:[#allocation0]]
  $region93: #{encoder_block_pallas.1} parent=0
    _
  %s12 = ssub.s32 1, %s10
  %s13 = scalar_select 0, %s12, %s10
  $region1: #{encoder_block_pallas.1} parent=0
    #allocation2 [shape = 'u8[8192]{0}', space=vmem, size = 0x2000, scoped, tag = 'input window, operand 0']
    #allocation3 [shape = 's32[2]{0}', space=sflag, size = 0x8, scoped, tag = 'scoped memory for encoder_block_pallas.1']
    #allocation4 [shape = 's32[2]{0}', space=sflag, size = 0x8, scoped, tag = 'scoped memory for encoder_block_pallas.1']
    #allocation5 [shape = 'u8[8192]{0}', space=vmem, size = 0x2000, scoped, tag = 'input window, operand 3, single buffered']
    #allocation6 [shape = 's32[1]{0}', space=sflag, size = 0x4, scoped, tag = 'scoped memory for encoder_block_pallas.1']
    #allocation7 [shape = 'u8[8192]{0}', space=vmem, size = 0x2000, scoped, tag = 'input window, operand 4, single buffered']
    #allocation8 [shape = 'u8[16384]{0}', space=vmem, size = 0x4000, scoped, tag = 'input window, operand 5, single buffered']
    #allocation9 [shape = 's32[1]{0}', space=sflag, size = 0x4, scoped, tag = 'scoped memory for encoder_block_pallas.1']
    #allocation10 [shape = 'u8[12288]{0}', space=vmem, size = 0x3000, scoped, tag = 'input window, operand 6, single buffered']
    #allocation11 [shape = 'u8[24576]{0}', space=vmem, size = 0x6000, scoped, tag = 'input window, operand 7, single buffered']
    #allocation12 [shape = 's32[1]{0}', space=sflag, size = 0x4, scoped, tag = 'scoped memory for encoder_block_pallas.1']
    #allocation13 [shape = 'u8[8192]{0}', space=vmem, size = 0x2000, scoped, tag = 'output window, operand 0']
    %14 = vsyncpa [#allocation3], 0
    %s15 = scalar_lea.sflag [#allocation3], 1
    %16 = vsyncpa %s15, 0
    %17 = vsyncpa [#allocation6], 0
    %18 = vsyncpa [#allocation9], 0
    %19 = vsyncpa [#allocation12], 0
    %20 = vsyncpa [#allocation4], 0
    %s21 = scalar_lea.sflag [#allocation4], 1
    %22 = vsyncpa %s21, 0
    loop: start=0, step=1, limit=4
    $region2: #{encoder_block_pallas.1} parent=1 // loop_pre_header
      _
    $region3: #{encoder_block_pallas.1} parent=1 // loop_header
      %s24 = sphi 0, %s28
      %p25 = scmp.ge.s32.totalorder %s24, 4
      %s34 = sphi 0, %s36
      %s37 = sphi 0, %s34
      %s38 = sphi 0, %s37
      %s54 = sphi 0, %s38
      %s58 = sphi 0, %s58
      %s60 = sphi 0, %s58
      %s61 = sphi 0, %s60
      %s75 = sphi 0, %s61
      %s79 = sphi 0, %s79
      %s81 = sphi 0, %s79
      %s82 = sphi 0, %s81
      %s96 = sphi 0, %s82
      %s100 = sphi 0, %s100
      %s102 = sphi 0, %s100
      %s103 = sphi 0, %s102
      %s117 = sphi 0, %s103
      %s121 = sphi 0, %s121
      %s123 = sphi 0, %s121
      %s124 = sphi 0, %s123
      %s138 = sphi 0, %s124
      %s142 = sphi 0, %s142
      %s144 = sphi 0, %s142
      %s145 = sphi 0, %s144
      %s159 = sphi 0, %s145
      %s163 = sphi 0, %s163
      %s165 = sphi 0, %s163
      %s166 = sphi 0, %s165
      %s180 = sphi 0, %s166
      %s184 = sphi 0, %s184
      %s186 = sphi 0, %s184
      %s187 = sphi 0, %s186
      %s201 = sphi 0, %s187
      %s205 = sphi 0, %s205
      %s207 = sphi 0, %s205
      %s208 = sphi 0, %s207
      %s222 = sphi 0, %s208
      %s228 = sphi 0, %s230
      %s231 = sphi 0, %s228
      %s232 = sphi 0, %s231
      %s248 = sphi 0, %s232
    $region4: #{encoder_block_pallas.1} parent=1 // loop_header_branch
      %27 = sbr.rel (%p25) target = $region8
    $region5: #{encoder_block_pallas.1} parent=1 // loop_body
      %s29 = ssub.s32 %s24, 1
      %s30 = ssub.s32 %s24, 2
      %s31 = sadd.s32 %s24, 1
      %s32 = ssub.s32 %s24, %s31
      %p33 = scmp.eq.s32.totalorder %s32, 0
      %s35 = sadd.s32 %s34, 1
      %s36 = scalar_select %p33, %s34, %s35
      %p39 = pneg %p33
      %p40 = scmp.eq.s32.totalorder %s24, 1
      %p41 = por %p39, %p40
      %p42 = scmp.ne.s32.totalorder %s34, %s37
      %p43 = scmp.eq.s32.totalorder %s24, 0
      %p44 = por %p42, %p43
      %p45 = scmp.ne.s32.totalorder %s34, %s37
      %p46 = scmp.eq.s32.totalorder %s29, 1
      %p47 = por %p45, %p46
      %p48 = scmp.ne.s32.totalorder %s37, %s38
      %p49 = scmp.eq.s32.totalorder %s29, 0
      %p50 = por %p48, %p49
      %p51 = scmp.ne.s32.totalorder %s37, %s38
      %p52 = scmp.eq.s32.totalorder %s30, 1
      %p53 = por %p51, %p52
      %p55 = scmp.ne.s32.totalorder %s38, %s54
      %p56 = scmp.eq.s32.totalorder %s30, 0
      %p57 = por %p55, %p56
      %s59 = sadd.s32 %s58, 1
      %p62 = scmp.eq.s32.totalorder %s24, 1
      %p63 = scmp.ne.s32.totalorder %s58, %s60
      %p64 = scmp.eq.s32.totalorder %s24, 0
      %p65 = por %p63, %p64
      %p66 = scmp.ne.s32.totalorder %s58, %s60
      %p67 = scmp.eq.s32.totalorder %s29, 1
      %p68 = por %p66, %p67
      %p69 = scmp.ne.s32.totalorder %s60, %s61
      %p70 = scmp.eq.s32.totalorder %s29, 0
      %p71 = por %p69, %p70
      %p72 = scmp.ne.s32.totalorder %s60, %s61
      %p73 = scmp.eq.s32.totalorder %s30, 1
      %p74 = por %p72, %p73
      %p76 = scmp.ne.s32.totalorder %s61, %s75
      %p77 = scmp.eq.s32.totalorder %s30, 0
      %p78 = por %p76, %p77
      %s80 = sadd.s32 %s79, 1
      %p83 = scmp.eq.s32.totalorder %s24, 1
      %p84 = scmp.ne.s32.totalorder %s79, %s81
      %p85 = scmp.eq.s32.totalorder %s24, 0
      %p86 = por %p84, %p85
      %p87 = scmp.ne.s32.totalorder %s79, %s81
      %p88 = scmp.eq.s32.totalorder %s29, 1
      %p89 = por %p87, %p88
      %p90 = scmp.ne.s32.totalorder %s81, %s82
      %p91 = scmp.eq.s32.totalorder %s29, 0
      %p92 = por %p90, %p91
      %p93 = scmp.ne.s32.totalorder %s81, %s82
      %p94 = scmp.eq.s32.totalorder %s30, 1
      %p95 = por %p93, %p94
      %p97 = scmp.ne.s32.totalorder %s82, %s96
      %p98 = scmp.eq.s32.totalorder %s30, 0
      %p99 = por %p97, %p98
      %s101 = sadd.s32 %s100, 1
      %p104 = scmp.eq.s32.totalorder %s24, 1
      %p105 = scmp.ne.s32.totalorder %s100, %s102
      %p106 = scmp.eq.s32.totalorder %s24, 0
      %p107 = por %p105, %p106
      %p108 = scmp.ne.s32.totalorder %s100, %s102
      %p109 = scmp.eq.s32.totalorder %s29, 1
      %p110 = por %p108, %p109
      %p111 = scmp.ne.s32.totalorder %s102, %s103
      %p112 = scmp.eq.s32.totalorder %s29, 0
      %p113 = por %p111, %p112
      %p114 = scmp.ne.s32.totalorder %s102, %s103
      %p115 = scmp.eq.s32.totalorder %s30, 1
      %p116 = por %p114, %p115
      %p118 = scmp.ne.s32.totalorder %s103, %s117
      %p119 = scmp.eq.s32.totalorder %s30, 0
      %p120 = por %p118, %p119
      %s122 = sadd.s32 %s121, 1
      %p125 = scmp.eq.s32.totalorder %s24, 1
      %p126 = scmp.ne.s32.totalorder %s121, %s123
      %p127 = scmp.eq.s32.totalorder %s24, 0
      %p128 = por %p126, %p127
      %p129 = scmp.ne.s32.totalorder %s121, %s123
      %p130 = scmp.eq.s32.totalorder %s29, 1
      %p131 = por %p129, %p130
      %p132 = scmp.ne.s32.totalorder %s123, %s124
      %p133 = scmp.eq.s32.totalorder %s29, 0
      %p134 = por %p132, %p133
      %p135 = scmp.ne.s32.totalorder %s123, %s124
      %p136 = scmp.eq.s32.totalorder %s30, 1
      %p137 = por %p135, %p136
      %p139 = scmp.ne.s32.totalorder %s124, %s138
      %p140 = scmp.eq.s32.totalorder %s30, 0
      %p141 = por %p139, %p140
      %s143 = sadd.s32 %s142, 1
      %p146 = scmp.eq.s32.totalorder %s24, 1
      %p147 = scmp.ne.s32.totalorder %s142, %s144
      %p148 = scmp.eq.s32.totalorder %s24, 0
      %p149 = por %p147, %p148
      %p150 = scmp.ne.s32.totalorder %s142, %s144
      %p151 = scmp.eq.s32.totalorder %s29, 1
      %p152 = por %p150, %p151
      %p153 = scmp.ne.s32.totalorder %s144, %s145
      %p154 = scmp.eq.s32.totalorder %s29, 0
      %p155 = por %p153, %p154
      %p156 = scmp.ne.s32.totalorder %s144, %s145
      %p157 = scmp.eq.s32.totalorder %s30, 1
      %p158 = por %p156, %p157
      %p160 = scmp.ne.s32.totalorder %s145, %s159
      %p161 = scmp.eq.s32.totalorder %s30, 0
      %p162 = por %p160, %p161
      %s164 = sadd.s32 %s163, 1
      %p167 = scmp.eq.s32.totalorder %s24, 1
      %p168 = scmp.ne.s32.totalorder %s163, %s165
      %p169 = scmp.eq.s32.totalorder %s24, 0
      %p170 = por %p168, %p169
      %p171 = scmp.ne.s32.totalorder %s163, %s165
      %p172 = scmp.eq.s32.totalorder %s29, 1
      %p173 = por %p171, %p172
      %p174 = scmp.ne.s32.totalorder %s165, %s166
      %p175 = scmp.eq.s32.totalorder %s29, 0
      %p176 = por %p174, %p175
      %p177 = scmp.ne.s32.totalorder %s165, %s166
      %p178 = scmp.eq.s32.totalorder %s30, 1
      %p179 = por %p177, %p178
      %p181 = scmp.ne.s32.totalorder %s166, %s180
      %p182 = scmp.eq.s32.totalorder %s30, 0
      %p183 = por %p181, %p182
      %s185 = sadd.s32 %s184, 1
      %p188 = scmp.eq.s32.totalorder %s24, 1
      %p189 = scmp.ne.s32.totalorder %s184, %s186
      %p190 = scmp.eq.s32.totalorder %s24, 0
      %p191 = por %p189, %p190
      %p192 = scmp.ne.s32.totalorder %s184, %s186
      %p193 = scmp.eq.s32.totalorder %s29, 1
      %p194 = por %p192, %p193
      %p195 = scmp.ne.s32.totalorder %s186, %s187
      %p196 = scmp.eq.s32.totalorder %s29, 0
      %p197 = por %p195, %p196
      %p198 = scmp.ne.s32.totalorder %s186, %s187
      %p199 = scmp.eq.s32.totalorder %s30, 1
      %p200 = por %p198, %p199
      %p202 = scmp.ne.s32.totalorder %s187, %s201
      %p203 = scmp.eq.s32.totalorder %s30, 0
      %p204 = por %p202, %p203
      %s206 = sadd.s32 %s205, 1
      %p209 = scmp.eq.s32.totalorder %s24, 1
      %p210 = scmp.ne.s32.totalorder %s205, %s207
      %p211 = scmp.eq.s32.totalorder %s24, 0
      %p212 = por %p210, %p211
      %p213 = scmp.ne.s32.totalorder %s205, %s207
      %p214 = scmp.eq.s32.totalorder %s29, 1
      %p215 = por %p213, %p214
      %p216 = scmp.ne.s32.totalorder %s207, %s208
      %p217 = scmp.eq.s32.totalorder %s29, 0
      %p218 = por %p216, %p217
      %p219 = scmp.ne.s32.totalorder %s207, %s208
      %p220 = scmp.eq.s32.totalorder %s30, 1
      %p221 = por %p219, %p220
      %p223 = scmp.ne.s32.totalorder %s208, %s222
      %p224 = scmp.eq.s32.totalorder %s30, 0
      %p225 = por %p223, %p224
      %s226 = ssub.s32 %s24, %s31
      %p227 = scmp.eq.s32.totalorder %s226, 0
      %s229 = sadd.s32 %s228, 1
      %s230 = scalar_select %p227, %s228, %s229
      %p233 = pneg %p227
      %p234 = scmp.eq.s32.totalorder %s24, 1
      %p235 = por %p233, %p234
      %p236 = scmp.ne.s32.totalorder %s228, %s231
      %p237 = scmp.eq.s32.totalorder %s24, 0
      %p238 = por %p236, %p237
      %p239 = scmp.ne.s32.totalorder %s228, %s231
      %p240 = scmp.eq.s32.totalorder %s29, 1
      %p241 = por %p239, %p240
      %p242 = scmp.ne.s32.totalorder %s231, %s232
      %p243 = scmp.eq.s32.totalorder %s29, 0
      %p244 = por %p242, %p243
      %p245 = scmp.ne.s32.totalorder %s231, %s232
      %p246 = scmp.eq.s32.totalorder %s30, 1
      %p247 = por %p245, %p246
      %p249 = scmp.ne.s32.totalorder %s232, %s248
      %p250 = scmp.eq.s32.totalorder %s30, 0
      %p251 = por %p249, %p250
      %p252 = scmp.le.s32.totalorder 1, %s24
      %p253 = scmp.lt.s32.totalorder %s24, 3
      %p254 = pnand %p252, %p253
      %p255 = pneg %p254
      // Predicated region
      $region9: #{encoder_block_pallas.1} parent=5 // pred_check
        _
      $region10: #{encoder_block_pallas.1} parent=5 // pred_check_branch
        %257 = sbr.rel (%p254) target = $region12
      $region11: #{encoder_block_pallas.1} parent=5 // pred_region
        %s258 = ssub.s32 %s24, 1
        // Predicated region
        $region13: #{encoder_block_pallas.1} parent=11 // pred_check
          %p259 = pneg %p71
        $region14: #{encoder_block_pallas.1} parent=11 // pred_check_branch
          %261 = sbr.rel (%p259) target = $region16
        $region15: #{encoder_block_pallas.1} parent=11 // pred_region
          _
        $region16: #{encoder_block_pallas.1} parent=11 // pred_fallthru
          _
        // Predicated region
        $region17: #{encoder_block_pallas.1} parent=11 // pred_check
          %p262 = pneg %p92
        $region18: #{encoder_block_pallas.1} parent=11 // pred_check_branch
          %264 = sbr.rel (%p262) target = $region20
        $region19: #{encoder_block_pallas.1} parent=11 // pred_region
          _
        $region20: #{encoder_block_pallas.1} parent=11 // pred_fallthru
          _
        // Predicated region
        $region21: #{encoder_block_pallas.1} parent=11 // pred_check
          %p265 = pneg %p113
        $region22: #{encoder_block_pallas.1} parent=11 // pred_check_branch
          %267 = sbr.rel (%p265) target = $region24
        $region23: #{encoder_block_pallas.1} parent=11 // pred_region
          %s269 = ssub.s32 256, 256
          %270 = vsyncadd [#allocation6], %s269
          %s272 = sshll.u32 [#allocation5], 4
          %s273 = int_to_ptr.vmem [resolvable:$true] %s272
          %275 = dma.hbm_to_vmem [thread:$0]  %s3, 256, %s273, [#allocation6]
        $region24: #{encoder_block_pallas.1} parent=11 // pred_fallthru
          _
        // Predicated region
        $region25: #{encoder_block_pallas.1} parent=11 // pred_check
          %p276 = pneg %p134
        $region26: #{encoder_block_pallas.1} parent=11 // pred_check_branch
          %278 = sbr.rel (%p276) target = $region28
        $region27: #{encoder_block_pallas.1} parent=11 // pred_region
          %s280 = ssub.s32 256, 256
          %281 = vsyncadd [#allocation6], %s280
          %s283 = sshll.u32 [#allocation7], 4
          %s284 = int_to_ptr.vmem [resolvable:$true] %s283
          %286 = dma.hbm_to_vmem [thread:$0]  %s4, 256, %s284, [#allocation6]
        $region28: #{encoder_block_pallas.1} parent=11 // pred_fallthru
          _
        // Predicated region
        $region29: #{encoder_block_pallas.1} parent=11 // pred_check
          %p287 = pneg %p155
        $region30: #{encoder_block_pallas.1} parent=11 // pred_check_branch
          %289 = sbr.rel (%p287) target = $region32
        $region31: #{encoder_block_pallas.1} parent=11 // pred_region
          %s291 = ssub.s32 512, 512
          %292 = vsyncadd [#allocation9], %s291
          %s293 = sshll.u32 [#allocation8], 4
          %s294 = int_to_ptr.vmem [resolvable:$true] %s293
          %299 = dma.hbm_to_vmem [thread:$0]  %s5, 512, %s294, [#allocation9], 128, 128, 8
        $region32: #{encoder_block_pallas.1} parent=11 // pred_fallthru
          _
        // Predicated region
        $region33: #{encoder_block_pallas.1} parent=11 // pred_check
          %p300 = pneg %p176
        $region34: #{encoder_block_pallas.1} parent=11 // pred_check_branch
          %302 = sbr.rel (%p300) target = $region36
        $region35: #{encoder_block_pallas.1} parent=11 // pred_region
          %s304 = ssub.s32 384, 384
          %305 = vsyncadd [#allocation9], %s304
          %s306 = sshll.u32 [#allocation10], 4
          %s307 = int_to_ptr.vmem [resolvable:$true] %s306
          %312 = dma.hbm_to_vmem [thread:$0]  %s6, 384, %s307, [#allocation9], 64, 64, 4
        $region36: #{encoder_block_pallas.1} parent=11 // pred_fallthru
          _
        // Predicated region
        $region37: #{encoder_block_pallas.1} parent=11 // pred_check
          %p313 = pneg %p197
        $region38: #{encoder_block_pallas.1} parent=11 // pred_check_branch
          %315 = sbr.rel (%p313) target = $region40
        $region39: #{encoder_block_pallas.1} parent=11 // pred_region
          %s317 = ssub.s32 768, 768
          %318 = vsyncadd [#allocation12], %s317
          %s319 = sshll.u32 [#allocation11], 4
          %s320 = int_to_ptr.vmem [resolvable:$true] %s319
          %325 = dma.hbm_to_vmem [thread:$0]  %s7, 768, %s320, [#allocation12], 128, 128, 8
        $region40: #{encoder_block_pallas.1} parent=11 // pred_fallthru
          _
        // Predicated region
        $region41: #{encoder_block_pallas.1} parent=11 // pred_check
          %p326 = pneg %p218
        $region42: #{encoder_block_pallas.1} parent=11 // pred_check_branch
          %328 = sbr.rel (%p326) target = $region44
        $region43: #{encoder_block_pallas.1} parent=11 // pred_region
          _
        $region44: #{encoder_block_pallas.1} parent=11 // pred_fallthru
          _
      $region12: #{encoder_block_pallas.1} parent=5 // pred_fallthru
        _
      %p329 = scmp.lt.s32.totalorder %s24, 2
      // Predicated region
      $region45: #{encoder_block_pallas.1} parent=5 // pred_check
        %p330 = pneg %p329
      $region46: #{encoder_block_pallas.1} parent=5 // pred_check_branch
        %332 = sbr.rel (%p330) target = $region48
      $region47: #{encoder_block_pallas.1} parent=5 // pred_region
        // Predicated region
        $region49: #{encoder_block_pallas.1} parent=47 // pred_check
          %p333 = pneg %p44
        $region50: #{encoder_block_pallas.1} parent=47 // pred_check_branch
          %335 = sbr.rel (%p333) target = $region52
        $region51: #{encoder_block_pallas.1} parent=47 // pred_region
          %s336 = sand.u32 %s34, 1
          %s337 = scalar_lea.sflag [#allocation3], %s336
          %s338 = sand.u32 %s34, 1
          %s339 = smul.addr %s338, 8
          %s340 = scalar_lea.vmem [#allocation2], %s339
          %s342 = ssub.s32 128, 128
          %343 = vsyncadd %s337, %s342
          %s344 = smul.addr %s24, 128
          %s345 = scalar_lea.hbm %s0, %s344
          %s347 = sshll.u32 %s340, 4
          %s348 = int_to_ptr.vmem [resolvable:$true] %s347
          %350 = dma.hbm_to_vmem [thread:$0]  %s345, 128, %s348, %s337
        $region52: #{encoder_block_pallas.1} parent=47 // pred_fallthru
          _
      $region48: #{encoder_block_pallas.1} parent=5 // pred_fallthru
        _
      %p351 = scmp.le.s32.totalorder 1, %s24
      %p352 = scmp.lt.s32.totalorder %s24, 3
      %p353 = pnand %p351, %p352
      %p354 = pneg %p353
      // Predicated region
      $region53: #{encoder_block_pallas.1} parent=5 // pred_check
        _
      $region54: #{encoder_block_pallas.1} parent=5 // pred_check_branch
        %356 = sbr.rel (%p353) target = $region56
      $region55: #{encoder_block_pallas.1} parent=5 // pred_region
        %s357 = ssub.s32 %s24, 1
        %s358 = sand.u32 %s37, 1
        %s359 = scalar_lea.sflag [#allocation3], %s358
        %s360 = sand.u32 %s37, 1
        %s361 = smul.addr %s360, 8
        %s362 = scalar_lea.vmem [#allocation2], %s361
        // Predicated region
        $region57: #{encoder_block_pallas.1} parent=55 // pred_check
          %p363 = pneg %p50
        $region58: #{encoder_block_pallas.1} parent=55 // pred_check_branch
          %365 = sbr.rel (%p363) target = $region60
        $region59: #{encoder_block_pallas.1} parent=55 // pred_region
          %366 = dma.done %s359, 128
        $region60: #{encoder_block_pallas.1} parent=55 // pred_fallthru
          _
        // Predicated region
        $region61: #{encoder_block_pallas.1} parent=55 // pred_check
          %p367 = pneg %p113
        $region62: #{encoder_block_pallas.1} parent=55 // pred_check_branch
          %369 = sbr.rel (%p367) target = $region64
        $region63: #{encoder_block_pallas.1} parent=55 // pred_region
          %370 = dma.done [#allocation6], 256
        $region64: #{encoder_block_pallas.1} parent=55 // pred_fallthru
          _
        // Predicated region
        $region65: #{encoder_block_pallas.1} parent=55 // pred_check
          %p371 = pneg %p134
        $region66: #{encoder_block_pallas.1} parent=55 // pred_check_branch
          %373 = sbr.rel (%p371) target = $region68
        $region67: #{encoder_block_pallas.1} parent=55 // pred_region
          %374 = dma.done [#allocation6], 256
        $region68: #{encoder_block_pallas.1} parent=55 // pred_fallthru
          _
        // Predicated region
        $region69: #{encoder_block_pallas.1} parent=55 // pred_check
          %p375 = pneg %p155
        $region70: #{encoder_block_pallas.1} parent=55 // pred_check_branch
          %377 = sbr.rel (%p375) target = $region72
        $region71: #{encoder_block_pallas.1} parent=55 // pred_region
          %378 = dma.done [#allocation9], 512
        $region72: #{encoder_block_pallas.1} parent=55 // pred_fallthru
          _
        // Predicated region
        $region73: #{encoder_block_pallas.1} parent=55 // pred_check
          %p379 = pneg %p176
        $region74: #{encoder_block_pallas.1} parent=55 // pred_check_branch
          %381 = sbr.rel (%p379) target = $region76
        $region75: #{encoder_block_pallas.1} parent=55 // pred_region
          %382 = dma.done [#allocation9], 384
        $region76: #{encoder_block_pallas.1} parent=55 // pred_fallthru
          _
        // Predicated region
        $region77: #{encoder_block_pallas.1} parent=55 // pred_check
          %p383 = pneg %p197
        $region78: #{encoder_block_pallas.1} parent=55 // pred_check_branch
          %385 = sbr.rel (%p383) target = $region80
        $region79: #{encoder_block_pallas.1} parent=55 // pred_region
          %386 = dma.done [#allocation12], 768
        $region80: #{encoder_block_pallas.1} parent=55 // pred_fallthru
          _
        %s387 = sand.u32 %s37, 1
        %s388 = scalar_lea.sflag [#allocation3], %s387
        %s389 = sand.u32 %s37, 1
        %s390 = smul.addr %s389, 8
        %s391 = scalar_lea.vmem [#allocation2], %s390
        %p392 = pneg %p50
        %p393 = pneg %p47
        %p394 = pneg %p71
        %p395 = pneg %p68
        %p396 = pneg %p92
        %p397 = pneg %p89
        %p398 = pneg %p113
        %p399 = pneg %p110
        %p400 = pneg %p134
        %p401 = pneg %p131
        %p402 = pneg %p155
        %p403 = pneg %p152
        %p404 = pneg %p176
        %p405 = pneg %p173
        %p406 = pneg %p197
        %p407 = pneg %p194
        %p408 = pneg %p218
        %p409 = pneg %p215
        %p410 = pneg %p244
        %p411 = pneg %p241
        %s412 = sand.u32 %s231, 1
        %s413 = scalar_lea.sflag [#allocation4], %s412
        %s414 = sand.u32 %s231, 1
        %s415 = smul.addr %s414, 8
        %s416 = scalar_lea.vmem [#allocation13], %s415
        %v418 = vld [vmem:[%s362] sm:$0xff]
        %v419 = vmul.f32 %v418, %v418
        %vm420 = vcmask 392192
        %v421 = vsel %vm420, %v419, 0.0
        %422 = vadd.xlane.f32.xlu0 %v421
        %v423 = vpop.xlane.xlu0 %422
        %v424 = vrcp.pop 48.0
        %v425 = vmul.f32 %v423, %v424
        %v426 = vadd.f32 %v425, 1e-05
        %v427 = vrsqrt.pop %v426
        %v428 = vmul.f32 %v418, %v427
        %v429 = vpack.c.bf16 %v428, %v428
        %v430 = vld [vmem:[%s1] sm:$0xff]
        %v431 = vld [vmem:[%s1 + $0x8] sm:$0xff]
        %v432 = vld [vmem:[%s1 + $0x10] sm:$0xff]
        %v433 = vld [vmem:[%s1 + $0x18] sm:$0xff]
        %v434 = vld [vmem:[%s1 + $0x20] sm:$0xff]
        %v435 = vld [vmem:[%s1 + $0x28] sm:$0xff]
        %v442 = vunpack.c.l.b16 %v430
        %v443 = vunpack.c.h.b16 %v430
        %v444 = vunpack.c.l.b16 %v431
        %v445 = vunpack.c.h.b16 %v431
        %v446 = vunpack.c.l.b16 %v432
        %v447 = vunpack.c.h.b16 %v432
        %v448 = vunpack.c.l.b16 %v433
        %v449 = vunpack.c.h.b16 %v433
        %v450 = vunpack.c.l.b16 %v434
        %v451 = vunpack.c.h.b16 %v434
        %v452 = vunpack.c.l.b16 %v435
        %v453 = vunpack.c.h.b16 %v435
        %v454 = vpack.c.b16 %v444, %v442
        %v455 = vpack.c.b16 %v445, %v443
        %v456 = vpack.c.b16 %v448, %v446
        %v457 = vpack.c.b16 %v449, %v447
        %v458 = vpack.c.b16 %v452, %v450
        %v459 = vpack.c.b16 %v453, %v451
        %v467 = vsel %vm420, %v429, 0
        %469 = vmatprep.subr.bf16.mxu0 0
        %470 = vmatpush1.bf16.msra.mxu0 0
        %471 = vmatprep.subr.bf16.mxu0 0
        %472 = vmatpush1.bf16.msra.mxu0 0
        %473 = vmatprep.subr.bf16.mxu0 0
        %474 = vmatpush1.bf16.msra.mxu0 0
        %475 = vmatprep.subr.bf16.mxu0 0
        %476 = vmatpush1.bf16.msra.mxu0 0
        %477 = vmatprep.subr.bf16.mxu0 0
        %478 = vmatpush1.bf16.msra.mxu0 0
        %479 = vmatprep.subr.bf16.mxu0 %v459
        %480 = vmatpush1.bf16.msra.mxu0 %v458
        %481 = vmatprep.subr.bf16.mxu0 %v457
        %482 = vmatpush1.bf16.msra.mxu0 %v456
        %483 = vmatprep.subr.bf16.mxu0 %v455
        %484 = vmatpush1.bf16.msra.mxu0 %v454
        %485 = vmatprep.subr.bf16.mxu0 0
        %486 = vmatpush2.bf16.msra.mxu0 0
        %487 = vmatprep.subr.bf16.mxu0 0
        %488 = vmatpush2.bf16.msra.mxu0 0
        %489 = vmatprep.subr.bf16.mxu0 0
        %490 = vmatpush2.bf16.msra.mxu0 0
        %491 = vmatprep.subr.bf16.mxu0 0
        %492 = vmatpush2.bf16.msra.mxu0 0
        %493 = vmatprep.subr.bf16.mxu0 0
        %494 = vmatpush2.bf16.msra.mxu0 0
        %495 = vmatprep.subr.bf16.mxu0 0
        %496 = vmatpush2.bf16.msra.mxu0 0
        %497 = vmatprep.subr.bf16.mxu0 0
        %498 = vmatpush2.bf16.msra.mxu0 0
        %499 = vmatprep.subr.bf16.mxu0 0
        %500 = vmatpush2.bf16.msra.mxu0 0
        %501 = vmatprep.mubr.bf16.mxu0 0
        %502 = vmatmul.mubr.bf16.gmra.mxu0 %v467
        %v503 = vpop.f32.mrf.mxu0
        %v504 = vadd.f32 0.0, %v503
        %v505 = vpop.f32.mrf.mxu0
        %v506 = vadd.f32 0.0, %v505
        %v507 = vpop.f32.mrf.mxu0
        %v508 = vpop.f32.mrf.mxu0
        %509 = vdwg.mxu0
        %v510 = vld [vmem:[%s2] sm:$0xff]
        %v511 = vld [vmem:[%s2 + $0x8] sm:$0xff]
        %v512 = vld [vmem:[%s2 + $0x10] sm:$0xff]
        %v513 = vld [vmem:[%s2 + $0x18] sm:$0xff]
        %v514 = vld [vmem:[%s2 + $0x20] sm:$0xff]
        %v515 = vld [vmem:[%s2 + $0x28] sm:$0xff]
        %v522 = vunpack.c.l.b16 %v510
        %v523 = vunpack.c.h.b16 %v510
        %v524 = vunpack.c.l.b16 %v511
        %v525 = vunpack.c.h.b16 %v511
        %v526 = vunpack.c.l.b16 %v512
        %v527 = vunpack.c.h.b16 %v512
        %v528 = vunpack.c.l.b16 %v513
        %v529 = vunpack.c.h.b16 %v513
        %v530 = vunpack.c.l.b16 %v514
        %v531 = vunpack.c.h.b16 %v514
        %v532 = vunpack.c.l.b16 %v515
        %v533 = vunpack.c.h.b16 %v515
        %v534 = vpack.c.b16 %v524, %v522
        %v535 = vpack.c.b16 %v525, %v523
        %v536 = vpack.c.b16 %v528, %v526
        %v537 = vpack.c.b16 %v529, %v527
        %v538 = vpack.c.b16 %v532, %v530
        %v539 = vpack.c.b16 %v533, %v531
        %546 = vmatprep.subr.bf16.mxu0 0
        %547 = vmatpush1.bf16.msra.mxu0 0
        %548 = vmatprep.subr.bf16.mxu0 0
        %549 = vmatpush1.bf16.msra.mxu0 0
        %550 = vmatprep.subr.bf16.mxu0 0
        %551 = vmatpush1.bf16.msra.mxu0 0
        %552 = vmatprep.subr.bf16.mxu0 0
        %553 = vmatpush1.bf16.msra.mxu0 0
        %554 = vmatprep.subr.bf16.mxu0 0
        %555 = vmatpush1.bf16.msra.mxu0 0
        %556 = vmatprep.subr.bf16.mxu0 %v539
        %557 = vmatpush1.bf16.msra.mxu0 %v538
        %558 = vmatprep.subr.bf16.mxu0 %v537
        %559 = vmatpush1.bf16.msra.mxu0 %v536
        %560 = vmatprep.subr.bf16.mxu0 %v535
        %561 = vmatpush1.bf16.msra.mxu0 %v534
        %562 = vmatprep.subr.bf16.mxu0 0
        %563 = vmatpush2.bf16.msra.mxu0 0
        %564 = vmatprep.subr.bf16.mxu0 0
        %565 = vmatpush2.bf16.msra.mxu0 0
        %566 = vmatprep.subr.bf16.mxu0 0
        %567 = vmatpush2.bf16.msra.mxu0 0
        %568 = vmatprep.subr.bf16.mxu0 0
        %569 = vmatpush2.bf16.msra.mxu0 0
        %570 = vmatprep.subr.bf16.mxu0 0
        %571 = vmatpush2.bf16.msra.mxu0 0
        %572 = vmatprep.subr.bf16.mxu0 0
        %573 = vmatpush2.bf16.msra.mxu0 0
        %574 = vmatprep.subr.bf16.mxu0 0
        %575 = vmatpush2.bf16.msra.mxu0 0
        %576 = vmatprep.subr.bf16.mxu0 0
        %577 = vmatpush2.bf16.msra.mxu0 0
        %578 = vmatprep.mubr.bf16.mxu0 0
        %579 = vmatmul.mubr.bf16.gmra.mxu0 %v467
        %v580 = vpop.f32.mrf.mxu0
        %v581 = vadd.f32 0.0, %v580
        %v582 = vpop.f32.mrf.mxu0
        %v583 = vadd.f32 0.0, %v582
        %v584 = vpop.f32.mrf.mxu0
        %v585 = vpop.f32.mrf.mxu0
        %586 = vdwg.mxu0
        %v587 = vld [vmem:[#allocation5] sm:$0xff]
        %v588 = vld [vmem:[#allocation5 + $0x8] sm:$0xff]
        %v589 = vmul.f32 %v504, %v587
        %v590 = vmul.f32 %v506, %v588
        %v591 = vld [vmem:[#allocation7] sm:$0xff]
        %v592 = vld [vmem:[#allocation7 + $0x8] sm:$0xff]
        %v593 = vmul.f32 %v581, %v591
        %v594 = vmul.f32 %v583, %v592
        %v595 = vadd.f32 %v589, %v593
        %v596 = vadd.f32 %v590, %v594
        %v597 = vpack.c.bf16 %v595, %v595
        %v598 = vld [vmem:[#allocation8] sm:$0xff]
        %v599 = vld [vmem:[#allocation8 + $0x8] sm:$0xff]
        %v600 = vld [vmem:[#allocation8 + $0x10] sm:$0xff]
        %v601 = vld [vmem:[#allocation8 + $0x18] sm:$0xff]
        %v602 = vpack.c.bf16 %v599, %v598
        %v603 = vpack.c.bf16 %v601, %v600
        %608 = vrot.lane.b32.xlu0 %v598, 48
        %v609 = vpop.permute.xlu0 %608
        %610 = vrot.lane.b32.xlu0 %v599, 48
        %v611 = vpop.permute.xlu0 %610
        %612 = vrot.lane.b32.xlu0 %v600, 48
        %v613 = vpop.permute.xlu0 %612
        %614 = vrot.lane.b32.xlu0 %v601, 48
        %v615 = vpop.permute.xlu0 %614
        %v620 = vmul.f32 %v595, %v609
        %v621 = vmul.f32 %v595, %v611
        %v622 = vmul.f32 %v595, %v613
        %v623 = vmul.f32 %v595, %v615
        %v624 = vpack.c.bf16 %v621, %v620
        %v625 = vpack.c.bf16 %v623, %v622
        %626 = vrot.lane.b32.xlu0 %v598, 96
        %v627 = vpop.permute.xlu0 %626
        %628 = vrot.lane.b32.xlu0 %v599, 96
        %v629 = vpop.permute.xlu0 %628
        %630 = vrot.lane.b32.xlu0 %v600, 96
        %v631 = vpop.permute.xlu0 %630
        %632 = vrot.lane.b32.xlu0 %v601, 96
        %v633 = vpop.permute.xlu0 %632
        %v638 = vmul.f32 %v595, %v627
        %v639 = vmul.f32 %v596, %v627
        %v640 = vmul.f32 %v595, %v629
        %v641 = vmul.f32 %v596, %v629
        %v642 = vmul.f32 %v595, %v631
        %v643 = vmul.f32 %v596, %v631
        %v644 = vmul.f32 %v595, %v633
        %v645 = vmul.f32 %v596, %v633
        %v646 = vpack.c.bf16 %v640, %v638
        %v647 = vpack.c.bf16 %v641, %v639
        %v648 = vpack.c.bf16 %v644, %v642
        %v649 = vpack.c.bf16 %v645, %v643
        %652 = vrot.lane.b32.xlu0 %v624, 80
        %v653 = vpop.permute.xlu0 %652
        %654 = vrot.lane.b32.xlu0 %v625, 80
        %v655 = vpop.permute.xlu0 %654
        %v657 = vsel %vm420, %v597, 0
        %v660 = vsel %vm420, %v653, 0
        %v663 = vsel %vm420, %v655, 0
        %665 = vmatprep.subr.bf16.mxu0 0
        %666 = vmatpush1.bf16.xpose.msra.mxu0 0
        %667 = vmatprep.subr.bf16.mxu0 0
        %668 = vmatpush1.bf16.xpose.msra.mxu0 0
        %669 = vmatprep.subr.bf16.mxu0 0
        %670 = vmatpush1.bf16.xpose.msra.mxu0 0
        %671 = vmatprep.subr.bf16.mxu0 0
        %672 = vmatpush1.bf16.xpose.msra.mxu0 0
        %673 = vmatprep.subr.bf16.mxu0 0
        %674 = vmatpush1.bf16.xpose.msra.mxu0 0
        %675 = vmatprep.subr.bf16.mxu0 0
        %676 = vmatpush1.bf16.xpose.msra.mxu0 0
        %677 = vmatprep.subr.bf16.mxu0 0
        %678 = vmatpush1.bf16.xpose.msra.mxu0 %v663
        %679 = vmatprep.subr.bf16.mxu0 0
        %680 = vmatpush1.bf16.xpose.msra.mxu0 %v660
        %681 = vmatprep.subr.bf16.mxu0 0
        %682 = vmatpush2.bf16.xpose.msra.mxu0 0
        %683 = vmatprep.subr.bf16.mxu0 0
        %684 = vmatpush2.bf16.xpose.msra.mxu0 0
        %685 = vmatprep.subr.bf16.mxu0 0
        %686 = vmatpush2.bf16.xpose.msra.mxu0 0
        %687 = vmatprep.subr.bf16.mxu0 0
        %688 = vmatpush2.bf16.xpose.msra.mxu0 0
        %689 = vmatprep.subr.bf16.mxu0 0
        %690 = vmatpush2.bf16.xpose.msra.mxu0 0
        %691 = vmatprep.subr.bf16.mxu0 0
        %692 = vmatpush2.bf16.xpose.msra.mxu0 0
        %693 = vmatprep.subr.bf16.mxu0 0
        %694 = vmatpush2.bf16.xpose.msra.mxu0 0
        %695 = vmatprep.subr.bf16.mxu0 0
        %696 = vmatpush2.bf16.xpose.msra.mxu0 0
        %697 = vmatprep.mubr.bf16.mxu0 0
        %698 = vmatmul.mubr.bf16.gmra.mxu0 %v657
        %v699 = vpop.f32.mrf.mxu0
        %v700 = vadd.f32 0.0, %v699
        %v701 = vpop.f32.mrf.mxu0
        %v702 = vpop.f32.mrf.mxu0
        %v703 = vpop.f32.mrf.mxu0
        %704 = vdwg.mxu0
        %vm705 = vcmask 261120
        %v706 = vsel %vm705, %v700, -inf
        %707 = vmax.xlane.f32.xlu0 %v706
        %v708 = vpop.xlane.xlu0 %707
        %v709 = vsub.f32 %v700, %v708
        %v710 = vmul.f32 %v709, 1.442695
        %v711 = vpow.pop %v710
        %v712 = vpack.c.bf16 %v711, %v711
        %717 = vrot.lane.b32.xlu0 %v646, 32
        %v718 = vpop.permute.xlu0 %717
        %719 = vrot.lane.b32.xlu0 %v647, 32
        %v720 = vpop.permute.xlu0 %719
        %721 = vrot.lane.b32.xlu0 %v648, 32
        %v722 = vpop.permute.xlu0 %721
        %723 = vrot.lane.b32.xlu0 %v649, 32
        %v724 = vpop.permute.xlu0 %723
        %vm725 = vcmask 261120
        %v726 = vsel %vm725, %v718, %v720
        %v727 = vsel %vm725, %v722, %v724
        %v731 = vsel %vm705, %v712, 0
        %733 = vmatprep.subr.bf16.mxu0 0
        %734 = vmatpush1.bf16.msra.mxu0 0
        %735 = vmatprep.subr.bf16.mxu0 0
        %736 = vmatpush1.bf16.msra.mxu0 0
        %737 = vmatprep.subr.bf16.mxu0 0
        %738 = vmatpush1.bf16.msra.mxu0 0
        %739 = vmatprep.subr.bf16.mxu0 0
        %740 = vmatpush1.bf16.msra.mxu0 0
        %741 = vmatprep.subr.bf16.mxu0 0
        %742 = vmatpush1.bf16.msra.mxu0 0
        %743 = vmatprep.subr.bf16.mxu0 0
        %744 = vmatpush1.bf16.msra.mxu0 0
        %745 = vmatprep.subr.bf16.mxu0 0
        %746 = vmatpush1.bf16.msra.mxu0 %v727
        %747 = vmatprep.subr.bf16.mxu0 0
        %748 = vmatpush1.bf16.msra.mxu0 %v726
        %749 = vmatprep.subr.bf16.mxu0 0
        %750 = vmatpush2.bf16.msra.mxu0 0
        %751 = vmatprep.subr.bf16.mxu0 0
        %752 = vmatpush2.bf16.msra.mxu0 0
        %753 = vmatprep.subr.bf16.mxu0 0
        %754 = vmatpush2.bf16.msra.mxu0 0
        %755 = vmatprep.subr.bf16.mxu0 0
        %756 = vmatpush2.bf16.msra.mxu0 0
        %757 = vmatprep.subr.bf16.mxu0 0
        %758 = vmatpush2.bf16.msra.mxu0 0
        %759 = vmatprep.subr.bf16.mxu0 0
        %760 = vmatpush2.bf16.msra.mxu0 0
        %761 = vmatprep.subr.bf16.mxu0 0
        %762 = vmatpush2.bf16.msra.mxu0 0
        %763 = vmatprep.subr.bf16.mxu0 0
        %764 = vmatpush2.bf16.msra.mxu0 0
        %765 = vmatprep.mubr.bf16.mxu0 0
        %766 = vmatmul.mubr.bf16.gmra.mxu0 %v731
        %v767 = vpop.f32.mrf.mxu0
        %v768 = vadd.f32 0.0, %v767
        %v769 = vpop.f32.mrf.mxu0
        %v770 = vpop.f32.mrf.mxu0
        %v771 = vpop.f32.mrf.mxu0
        %772 = vdwg.mxu0
        %773 = vmatprep.subr.bf16.mxu0 0
        %774 = vmatpush1.bf16.msra.mxu0 0
        %775 = vmatprep.subr.bf16.mxu0 0
        %776 = vmatpush1.bf16.msra.mxu0 0
        %777 = vmatprep.subr.bf16.mxu0 0
        %778 = vmatpush1.bf16.msra.mxu0 0
        %779 = vmatprep.subr.bf16.mxu0 0
        %780 = vmatpush1.bf16.msra.mxu0 0
        %781 = vmatprep.subr.bf16.mxu0 0
        %782 = vmatpush1.bf16.msra.mxu0 0
        %783 = vmatprep.subr.bf16.mxu0 0
        %784 = vmatpush1.bf16.msra.mxu0 0
        %785 = vmatprep.subr.bf16.mxu0 0
        %786 = vmatpush1.bf16.msra.mxu0 %v603
        %787 = vmatprep.subr.bf16.mxu0 0
        %788 = vmatpush1.bf16.msra.mxu0 %v602
        %789 = vmatprep.subr.bf16.mxu0 0
        %790 = vmatpush2.bf16.msra.mxu0 0
        %791 = vmatprep.subr.bf16.mxu0 0
        %792 = vmatpush2.bf16.msra.mxu0 0
        %793 = vmatprep.subr.bf16.mxu0 0
        %794 = vmatpush2.bf16.msra.mxu0 0
        %795 = vmatprep.subr.bf16.mxu0 0
        %796 = vmatpush2.bf16.msra.mxu0 0
        %797 = vmatprep.subr.bf16.mxu0 0
        %798 = vmatpush2.bf16.msra.mxu0 0
        %799 = vmatprep.subr.bf16.mxu0 0
        %800 = vmatpush2.bf16.msra.mxu0 0
        %801 = vmatprep.subr.bf16.mxu0 0
        %802 = vmatpush2.bf16.msra.mxu0 0
        %803 = vmatprep.subr.bf16.mxu0 0
        %804 = vmatpush2.bf16.msra.mxu0 0
        %805 = vmatprep.mubr.bf16.mxu0 0
        %806 = vmatmul.mubr.bf16.gmra.mxu0 %v731
        %v807 = vpop.f32.mrf.mxu0
        %v808 = vadd.f32 0.0, %v807
        %v809 = vpop.f32.mrf.mxu0
        %v810 = vpop.f32.mrf.mxu0
        %v811 = vpop.f32.mrf.mxu0
        %812 = vdwg.mxu0
        %v813 = vrcp.pop %v808
        %v814 = vmul.f32 %v768, %v813
        %v815 = vpack.c.bf16 %v814, %v814
        %v816 = vld [vmem:[#allocation10] sm:$0xf]
        %v817 = vld [vmem:[#allocation10 + $0x4] sm:$0xf]
        %v818 = vld [vmem:[#allocation10 + $0x8] sm:$0xf]
        %v819 = vld [vmem:[#allocation10 + $0xc] sm:$0xf]
        %v820 = vld [vmem:[#allocation10 + $0x10] sm:$0xf]
        %v821 = vld [vmem:[#allocation10 + $0x14] sm:$0xf]
        %v828 = vunpack.c.l.b16 %v816
        %v829 = vunpack.c.l.b16 %v817
        %v830 = vunpack.c.l.b16 %v818
        %v831 = vunpack.c.l.b16 %v819
        %v832 = vunpack.c.l.b16 %v820
        %v833 = vunpack.c.l.b16 %v821
        %v834 = vpack.c.b16 %v829, %v828
        %v835 = vpack.c.b16 %v831, %v830
        %v836 = vpack.c.b16 %v833, %v832
        %v841 = vsel %vm420, %v815, 0
        %843 = vmatprep.subr.bf16.mxu0 0
        %844 = vmatpush1.bf16.msra.mxu0 0
        %845 = vmatprep.subr.bf16.mxu0 0
        %846 = vmatpush1.bf16.msra.mxu0 0
        %847 = vmatprep.subr.bf16.mxu0 0
        %848 = vmatpush1.bf16.msra.mxu0 0
        %849 = vmatprep.subr.bf16.mxu0 0
        %850 = vmatpush1.bf16.msra.mxu0 0
        %851 = vmatprep.subr.bf16.mxu0 0
        %852 = vmatpush1.bf16.msra.mxu0 0
        %853 = vmatprep.subr.bf16.mxu0 0
        %854 = vmatpush1.bf16.msra.mxu0 %v836
        %855 = vmatprep.subr.bf16.mxu0 0
        %856 = vmatpush1.bf16.msra.mxu0 %v835
        %857 = vmatprep.subr.bf16.mxu0 0
        %858 = vmatpush1.bf16.msra.mxu0 %v834
        %859 = vmatprep.subr.bf16.mxu0 0
        %860 = vmatpush2.bf16.msra.mxu0 0
        %861 = vmatprep.subr.bf16.mxu0 0
        %862 = vmatpush2.bf16.msra.mxu0 0
        %863 = vmatprep.subr.bf16.mxu0 0
        %864 = vmatpush2.bf16.msra.mxu0 0
        %865 = vmatprep.subr.bf16.mxu0 0
        %866 = vmatpush2.bf16.msra.mxu0 0
        %867 = vmatprep.subr.bf16.mxu0 0
        %868 = vmatpush2.bf16.msra.mxu0 0
        %869 = vmatprep.subr.bf16.mxu0 0
        %870 = vmatpush2.bf16.msra.mxu0 0
        %871 = vmatprep.subr.bf16.mxu0 0
        %872 = vmatpush2.bf16.msra.mxu0 0
        %873 = vmatprep.subr.bf16.mxu0 0
        %874 = vmatpush2.bf16.msra.mxu0 0
        %875 = vmatprep.mubr.bf16.mxu0 0
        %876 = vmatmul.mubr.bf16.gmra.mxu0 %v841
        %v877 = vpop.f32.mrf.mxu0
        %v878 = vadd.f32 0.0, %v877
        %v879 = vpop.f32.mrf.mxu0
        %v880 = vpop.f32.mrf.mxu0
        %v881 = vpop.f32.mrf.mxu0
        %882 = vdwg.mxu0
        %v883 = vadd.f32 %v418, %v878
        %v884 = vmul.f32 %v883, %v883
        %v885 = vsel %vm420, %v884, 0.0
        %886 = vadd.xlane.f32.xlu0 %v885
        %v887 = vpop.xlane.xlu0 %886
        %v888 = vmul.f32 %v887, %v424
        %v889 = vadd.f32 %v888, 1e-05
        %v890 = vrsqrt.pop %v889
        %v891 = vmul.f32 %v883, %v890
        %v892 = vpack.c.bf16 %v891, %v891
        %v893 = vld [vmem:[#allocation11] sm:$0xff]
        %v894 = vld [vmem:[#allocation11 + $0x8] sm:$0xff]
        %v895 = vld [vmem:[#allocation11 + $0x10] sm:$0xff]
        %v896 = vld [vmem:[#allocation11 + $0x18] sm:$0xff]
        %v897 = vld [vmem:[#allocation11 + $0x20] sm:$0xff]
        %v898 = vld [vmem:[#allocation11 + $0x28] sm:$0xff]
        %v905 = vunpack.c.l.b16 %v893
        %v906 = vunpack.c.h.b16 %v893
        %v907 = vunpack.c.l.b16 %v894
        %v908 = vunpack.c.h.b16 %v894
        %v909 = vunpack.c.l.b16 %v895
        %v910 = vunpack.c.h.b16 %v895
        %v911 = vunpack.c.l.b16 %v896
        %v912 = vunpack.c.h.b16 %v896
        %v913 = vunpack.c.l.b16 %v897
        %v914 = vunpack.c.h.b16 %v897
        %v915 = vunpack.c.l.b16 %v898
        %v916 = vunpack.c.h.b16 %v898
        %v917 = vpack.c.b16 %v907, %v905
        %v918 = vpack.c.b16 %v908, %v906
        %v919 = vpack.c.b16 %v911, %v909
        %v920 = vpack.c.b16 %v912, %v910
        %v921 = vpack.c.b16 %v915, %v913
        %v922 = vpack.c.b16 %v916, %v914
        %v930 = vsel %vm420, %v892, 0
        %932 = vmatprep.subr.bf16.mxu0 0
        %933 = vmatpush1.bf16.msra.mxu0 0
        %934 = vmatprep.subr.bf16.mxu0 0
        %935 = vmatpush1.bf16.msra.mxu0 0
        %936 = vmatprep.subr.bf16.mxu0 0
        %937 = vmatpush1.bf16.msra.mxu0 0
        %938 = vmatprep.subr.bf16.mxu0 0
        %939 = vmatpush1.bf16.msra.mxu0 0
        %940 = vmatprep.subr.bf16.mxu0 0
        %941 = vmatpush1.bf16.msra.mxu0 0
        %942 = vmatprep.subr.bf16.mxu0 %v922
        %943 = vmatpush1.bf16.msra.mxu0 %v921
        %944 = vmatprep.subr.bf16.mxu0 %v920
        %945 = vmatpush1.bf16.msra.mxu0 %v919
        %946 = vmatprep.subr.bf16.mxu0 %v918
        %947 = vmatpush1.bf16.msra.mxu0 %v917
        %948 = vmatprep.subr.bf16.mxu0 0
        %949 = vmatpush2.bf16.msra.mxu0 0
        %950 = vmatprep.subr.bf16.mxu0 0
        %951 = vmatpush2.bf16.msra.mxu0 0
        %952 = vmatprep.subr.bf16.mxu0 0
        %953 = vmatpush2.bf16.msra.mxu0 0
        %954 = vmatprep.subr.bf16.mxu0 0
        %955 = vmatpush2.bf16.msra.mxu0 0
        %956 = vmatprep.subr.bf16.mxu0 0
        %957 = vmatpush2.bf16.msra.mxu0 0
        %958 = vmatprep.subr.bf16.mxu0 0
        %959 = vmatpush2.bf16.msra.mxu0 0
        %960 = vmatprep.subr.bf16.mxu0 0
        %961 = vmatpush2.bf16.msra.mxu0 0
        %962 = vmatprep.subr.bf16.mxu0 0
        %963 = vmatpush2.bf16.msra.mxu0 0
        %964 = vmatprep.mubr.bf16.mxu0 0
        %965 = vmatmul.mubr.bf16.gmra.mxu0 %v930
        %v966 = vpop.f32.mrf.mxu0
        %v967 = vadd.f32 0.0, %v966
        %v968 = vpop.f32.mrf.mxu0
        %v969 = vadd.f32 0.0, %v968
        %v970 = vpop.f32.mrf.mxu0
        %v971 = vpop.f32.mrf.mxu0
        %972 = vdwg.mxu0
        %v973 = vxor.u32 %v967, 2147483648
        %v974 = vmul.f32 %v973, 1.442695
        %v975 = vpow.pop %v974
        %v976 = vadd.f32 %v975, 1.0
        %v977 = vrcp.pop %v976
        %v978 = vmul.f32 1.0, %v977
        %v979 = vmul.f32 %v967, %v978
        %v980 = vmul.f32 %v979, %v969
        %v981 = vpack.c.bf16 %v980, %v980
        %v982 = vld [vmem:[%s8] sm:$0xf]
        %v983 = vld [vmem:[%s8 + $0x4] sm:$0xf]
        %v984 = vld [vmem:[%s8 + $0x8] sm:$0xf]
        %v985 = vld [vmem:[%s8 + $0xc] sm:$0xf]
        %v986 = vld [vmem:[%s8 + $0x10] sm:$0xf]
        %v987 = vld [vmem:[%s8 + $0x14] sm:$0xf]
        %v988 = vld [vmem:[%s8 + $0x18] sm:$0xf]
        %v989 = vld [vmem:[%s8 + $0x1c] sm:$0xf]
        %v990 = vld [vmem:[%s8 + $0x20] sm:$0xf]
        %v991 = vld [vmem:[%s8 + $0x24] sm:$0xf]
        %v992 = vld [vmem:[%s8 + $0x28] sm:$0xf]
        %v993 = vld [vmem:[%s8 + $0x2c] sm:$0xf]
        %v994 = vld [vmem:[%s8 + $0x30] sm:$0xf]
        %v995 = vld [vmem:[%s8 + $0x34] sm:$0xf]
        %v996 = vld [vmem:[%s8 + $0x38] sm:$0xf]
        %v997 = vld [vmem:[%s8 + $0x3c] sm:$0xf]
        %v1014 = vunpack.c.l.b16 %v982
        %v1015 = vunpack.c.l.b16 %v983
        %v1016 = vunpack.c.l.b16 %v984
        %v1017 = vunpack.c.l.b16 %v985
        %v1018 = vunpack.c.l.b16 %v986
        %v1019 = vunpack.c.l.b16 %v987
        %v1020 = vunpack.c.l.b16 %v988
        %v1021 = vunpack.c.l.b16 %v989
        %v1022 = vunpack.c.l.b16 %v990
        %v1023 = vunpack.c.l.b16 %v991
        %v1024 = vunpack.c.l.b16 %v992
        %v1025 = vunpack.c.l.b16 %v993
        %v1026 = vunpack.c.l.b16 %v994
        %v1027 = vunpack.c.l.b16 %v995
        %v1028 = vunpack.c.l.b16 %v996
        %v1029 = vunpack.c.l.b16 %v997
        %v1030 = vpack.c.b16 %v1015, %v1014
        %v1031 = vpack.c.b16 %v1017, %v1016
        %v1032 = vpack.c.b16 %v1019, %v1018
        %v1033 = vpack.c.b16 %v1021, %v1020
        %v1034 = vpack.c.b16 %v1023, %v1022
        %v1035 = vpack.c.b16 %v1025, %v1024
        %v1036 = vpack.c.b16 %v1027, %v1026
        %v1037 = vpack.c.b16 %v1029, %v1028
        %1046 = vmatprep.subr.bf16.mxu0 0
        %1047 = vmatpush1.bf16.msra.mxu0 %v1037
        %1048 = vmatprep.subr.bf16.mxu0 0
        %1049 = vmatpush1.bf16.msra.mxu0 %v1036
        %1050 = vmatprep.subr.bf16.mxu0 0
        %1051 = vmatpush1.bf16.msra.mxu0 %v1035
        %1052 = vmatprep.subr.bf16.mxu0 0
        %1053 = vmatpush1.bf16.msra.mxu0 %v1034
        %1054 = vmatprep.subr.bf16.mxu0 0
        %1055 = vmatpush1.bf16.msra.mxu0 %v1033
        %1056 = vmatprep.subr.bf16.mxu0 0
        %1057 = vmatpush1.bf16.msra.mxu0 %v1032
        %1058 = vmatprep.subr.bf16.mxu0 0
        %1059 = vmatpush1.bf16.msra.mxu0 %v1031
        %1060 = vmatprep.subr.bf16.mxu0 0
        %1061 = vmatpush1.bf16.msra.mxu0 %v1030
        %1062 = vmatprep.subr.bf16.mxu0 0
        %1063 = vmatpush2.bf16.msra.mxu0 0
        %1064 = vmatprep.subr.bf16.mxu0 0
        %1065 = vmatpush2.bf16.msra.mxu0 0
        %1066 = vmatprep.subr.bf16.mxu0 0
        %1067 = vmatpush2.bf16.msra.mxu0 0
        %1068 = vmatprep.subr.bf16.mxu0 0
        %1069 = vmatpush2.bf16.msra.mxu0 0
        %1070 = vmatprep.subr.bf16.mxu0 0
        %1071 = vmatpush2.bf16.msra.mxu0 0
        %1072 = vmatprep.subr.bf16.mxu0 0
        %1073 = vmatpush2.bf16.msra.mxu0 0
        %1074 = vmatprep.subr.bf16.mxu0 0
        %1075 = vmatpush2.bf16.msra.mxu0 0
        %1076 = vmatprep.subr.bf16.mxu0 0
        %1077 = vmatpush2.bf16.msra.mxu0 0
        %1078 = vmatprep.mubr.bf16.mxu0 0
        %1079 = vmatmul.mubr.bf16.gmra.mxu0 %v981
        %v1080 = vpop.f32.mrf.mxu0
        %v1081 = vadd.f32 0.0, %v1080
        %v1082 = vpop.f32.mrf.mxu0
        %v1083 = vpop.f32.mrf.mxu0
        %v1084 = vpop.f32.mrf.mxu0
        %1085 = vdwg.mxu0
        %v1086 = vadd.f32 %v883, %v1081
        %1087 = vst.msk [vmem:[%s416] sm:$0xff] %vm420, %v1086
        %s1088 = sand.u32 %s231, 1
        %s1089 = scalar_lea.sflag [#allocation4], %s1088
        %s1090 = sand.u32 %s231, 1
        %s1091 = smul.addr %s1090, 8
        %s1092 = scalar_lea.vmem [#allocation13], %s1091
        // Predicated region
        $region81: #{encoder_block_pallas.1} parent=55 // pred_check
          %p1093 = pneg %p241
        $region82: #{encoder_block_pallas.1} parent=55 // pred_check_branch
          %1095 = sbr.rel (%p1093) target = $region84
        $region83: #{encoder_block_pallas.1} parent=55 // pred_region
          %s1097 = ssub.s32 128, 128
          %1098 = vsyncadd %s1089, %s1097
          %s1099 = smul.addr %s29, 128
          %s1100 = scalar_lea.hbm %s9, %s1099
          %s1102 = sshll.u32 %s1092, 4
          %s1103 = int_to_ptr.vmem [resolvable:$true] %s1102
          %1105 = dma.vmem_to_hbm [thread:$0]  %s1103, 128, %s1100, %s1089
        $region84: #{encoder_block_pallas.1} parent=55 // pred_fallthru
          _
      $region56: #{encoder_block_pallas.1} parent=5 // pred_fallthru
        _
      %p1106 = scmp.le.s32.totalorder 2, %s24
      // Predicated region
      $region85: #{encoder_block_pallas.1} parent=5 // pred_check
        %p1107 = pneg %p1106
      $region86: #{encoder_block_pallas.1} parent=5 // pred_check_branch
        %1109 = sbr.rel (%p1107) target = $region88
      $region87: #{encoder_block_pallas.1} parent=5 // pred_region
        %s1110 = ssub.s32 %s24, 2
        // Predicated region
        $region89: #{encoder_block_pallas.1} parent=87 // pred_check
          %p1111 = pneg %p247
        $region90: #{encoder_block_pallas.1} parent=87 // pred_check_branch
          %1113 = sbr.rel (%p1111) target = $region92
        $region91: #{encoder_block_pallas.1} parent=87 // pred_region
          %s1114 = sand.u32 %s232, 1
          %s1115 = scalar_lea.sflag [#allocation4], %s1114
          %s1116 = sand.u32 %s232, 1
          %s1117 = smul.addr %s1116, 8
          %s1118 = scalar_lea.vmem [#allocation13], %s1117
          %1119 = dma.done %s1115, 128
        $region92: #{encoder_block_pallas.1} parent=87 // pred_fallthru
          _
      $region88: #{encoder_block_pallas.1} parent=5 // pred_fallthru
        _
    $region6: #{encoder_block_pallas.1} parent=1 // loop_footer
      %s28 = sadd.s32 1, %s24
    $region7: #{encoder_block_pallas.1} parent=1 // loop_footer_branch
      %23 = sbr.rel target = $region3
    $region8: #{encoder_block_pallas.1} parent=1 // loop_exit
      _
    %1120 = vsyncpa [#allocation3], 1
    %s1121 = scalar_lea.sflag [#allocation3], 1
    %1122 = vsyncpa %s1121, 1
    %1123 = vsyncpa [#allocation6], 1
    %1124 = vsyncpa [#allocation9], 1
    %1125 = vsyncpa [#allocation12], 1
    %1126 = vsyncpa [#allocation4], 1
    %s1127 = scalar_lea.sflag [#allocation4], 1
    %1128 = vsyncpa %s1127, 1

</llo_original>
